<compile_context>
chip_gen: v6e
topology: v6e:2x2x1
jax: 0.10.0
libtpu: 0.0.40
codegen_flags: <defaults>
</compile_context>

<pallas_src>
import functools

import jax
import jax.numpy as jnp
from jax import lax
from jax.experimental import pallas as pl
from jax.experimental.pallas import tpu as pltpu


LANE = 128
SUBLANE = 8
# Multiple of the minimum sublane tile for f32 (8), bf16 (16) and int8/fp8 (32),
# so one block shape is legal for every input dtype.
ROW_ALIGN = 32
# (4096, 128) f32 = 2 MiB per input buffer; 2 inputs x 2 pipeline buffers = 8 MiB,
# under v5e's 16 MiB default scoped VMEM and well under v6e/v7x's 32 MiB.
MAX_BLOCK_ROWS = 4096


def _mse_kernel(x_ref, t_ref, out_ref, acc_ref, *,
                block_rows, total_rows, inner_blocks, needs_mask):
    """Accumulate sum((x - t)^2) into a resident (8, 128) VMEM accumulator.

    Grid = (n_par, inner_blocks); axis 0 is "parallel" (one chunk per
    TensorCore on v7x), axis 1 is the sequential reduction axis.  Each parallel
    chunk emits one (8, 128) partial sum; the wrapper reduces the partials and
    divides by N (fused in the same jit).
    """
    i = pl.program_id(1)

    @pl.when(i == 0)
    def _init():
        acc_ref[...] = jnp.zeros_like(acc_ref)

    d = x_ref[...].astype(jnp.float32) - t_ref[...].astype(jnp.float32)
    sq = d * d

    def _fold(v):
        # (block_rows, 128) -> (8, 128): sums whole vregs, VALU-only (no XLU).
        return v.reshape(block_rows // SUBLANE, SUBLANE, LANE).sum(axis=0)

    if needs_mask:
        # Logical (unclamped) block id; the DMA index_map is clamped in-bounds.
        blk = pl.program_id(0) * inner_blocks + i
        is_partial = (blk + 1) * block_rows > total_rows

        @pl.when(is_partial)
        def _masked():
            # remaining <= 0 for the (clamped) padded grid step -> contributes 0.
            # jnp.where is a select, so garbage/NaN in padded rows is safe.
            remaining = total_rows - blk * block_rows
            row_ids = lax.broadcasted_iota(jnp.int32, (block_rows, LANE), 0)
            acc_ref[...] += _fold(jnp.where(row_ids < remaining, sq, 0.0))

        @pl.when(jnp.logical_not(is_partial))
        def _full():
            acc_ref[...] += _fold(sq)
    else:
        acc_ref[...] += _fold(sq)

    @pl.when(i == inner_blocks - 1)
    def _finalize():
        out_ref[...] = acc_ref[...]


def _to_slab(x):
    """View x as a (rows, 128) slab in its native dtype.

    Zero-copy (pure reshape) when numel % 128 == 0 and numel >= 32*128 — the
    common case for conv feature maps.  Only misaligned or tiny tensors pad.
    """
    n = x.size
    rows = max(pl.cdiv(n, LANE), ROW_ALIGN)
    flat = x.reshape(-1)
    pad = rows * LANE - n
    if pad:
        # TODO(synk): a truly zero-copy path for numel % 128 != 0 would need a
        # manual-DMA (pl.ANY) kernel; any XLA-level slice/pad copies the buffer.
        flat = jnp.pad(flat, (0, pad))
    return flat.reshape(rows, LANE)


@functools.partial(jax.jit, static_argnames=("max_block_rows",))
def _content_mse(x, t_slab, *, max_block_rows=MAX_BLOCK_ROWS):
    """mean((x - target)^2) over all elements, via the Pallas kernel."""
    n = x.size
    x_slab = _to_slab(x)                       # fuses with the kernel input (same jit)
    rows = x_slab.shape[0]

    block_rows = min(max_block_rows, (rows // ROW_ALIGN) * ROW_ALIGN)
    num_blocks = pl.cdiv(rows, block_rows)
    n_par = 2 if num_blocks >= 2 else 1        # v7x: one chunk per TensorCore
    inner = pl.cdiv(num_blocks, n_par)
    # Mask needed if the last real block is ragged OR the forced 2-way split
    # introduces a padded grid step (odd block count).
    needs_mask = (n_par * inner * block_rows) != rows
    last_blk = num_blocks - 1

    def in_map(p, i):
        # Clamp so the (at most one) padded grid step re-reads an in-bounds
        # block; its contribution is masked to zero inside the kernel.
        return (jnp.minimum(p * inner + i, last_blk), 0)

    kernel = functools.partial(
        _mse_kernel,
        block_rows=block_rows,
        total_rows=rows,
        inner_blocks=inner,
        needs_mask=needs_mask,
    )

    partials = pl.pallas_call(
        kernel,
        out_shape=jax.ShapeDtypeStruct((n_par * SUBLANE, LANE), jnp.float32),
        grid_spec=pltpu.PrefetchScalarGridSpec(
            num_scalar_prefetch=0,
            grid=(n_par, inner),
            in_specs=[
                pl.BlockSpec((block_rows, LANE), in_map),
                pl.BlockSpec((block_rows, LANE), in_map),
            ],
            # One resident (8,128) partial-sum block per parallel chunk.
            out_specs=pl.BlockSpec((SUBLANE, LANE), lambda p, i: (p, 0)),
            scratch_shapes=[pltpu.VMEM((SUBLANE, LANE), jnp.float32)],
        ),
        compiler_params=pltpu.CompilerParams(
            dimension_semantics=("parallel", "arbitrary"),
        ),
    )(x_slab, t_slab)

    return jnp.sum(partials) / jnp.float32(n)


class ContentLoss:
    """JAX/Pallas port of the PyTorch ContentLoss module."""

    def __init__(self, target):
        self.target = jax.lax.stop_gradient(target)
        self._target_slab = _to_slab(self.target)   # built once, native dtype
        # F.mse_loss(target, target) is identically 0; skip the kernel launch.
        self.loss = jnp.float32(0.0)

    def __call__(self, x):
        # TODO(synk): self.loss mutation is a Python-side effect (mirrors the
        # PyTorch module); it is not valid under an outer jax.jit/scan.
        if x.shape == self.target.shape:
            self.loss = _content_mse(x, self._target_slab)
        return x  # pass-through, exactly like the PyTorch forward


if __name__ == "__main__":
    key = jax.random.PRNGKey(0)
    k = jax.random.split(key, 8)

    # Case 1: NCHW activation-like shape (batch=2, channels=4, spatial=16x16).
    shape = (2, 4, 16, 16)
    target = jax.random.normal(k[0], shape, dtype=jnp.float32)
    x = jax.random.normal(k[1], shape, dtype=jnp.float32)

    layer = ContentLoss(target)
    out = jax.block_until_ready(layer(x))
    loss = jax.block_until_ready(layer.loss)

    ref_loss = jnp.mean((x - target) ** 2)
    assert out.shape == x.shape
    assert jnp.allclose(out, x)
    assert jnp.allclose(loss, ref_loss, rtol=1e-5, atol=1e-6), (loss, ref_loss)

    # Case 2: odd spatial dim (tiny slab, minimum-rows padding path).
    shape2 = (2, 4, 17, 16)
    target2 = jax.random.normal(k[2], shape2, dtype=jnp.float32)
    x2 = jax.random.normal(k[3], shape2, dtype=jnp.float32)

    layer2 = ContentLoss(target2)
    out2 = jax.block_until_ready(layer2(x2))
    loss2 = jax.block_until_ready(layer2.loss)
    ref_loss2 = jnp.mean((x2 - target2) ** 2)
    assert jnp.allclose(out2, x2)
    assert jnp.allclose(loss2, ref_loss2, rtol=1e-5, atol=1e-6), (loss2, ref_loss2)

    # Case 3: small max_block_rows to exercise the forced 2-way split with an
    # ODD block count: ragged last block, padded grid step, clamped index_map.
    shape3 = (2, 4, 72, 16)   # numel = 9216 -> 72 rows, blocks of 32 -> 3 blocks
    target3 = jax.random.normal(k[4], shape3, dtype=jnp.float32)
    x3 = jax.random.normal(k[5], shape3, dtype=jnp.float32)
    loss3 = jax.block_until_ready(
        _content_mse(x3, _to_slab(target3), max_block_rows=32))
    ref_loss3 = jnp.mean((x3 - target3) ** 2)
    assert jnp.allclose(loss3, ref_loss3, rtol=1e-5, atol=1e-6), (loss3, ref_loss3)

    # Case 4: bf16 inputs (in-kernel upcast, 32-row alignment covers bf16 tiles).
    shape4 = (2, 4, 64, 16)   # numel = 8192 -> 64 rows, 2 full blocks of 32
    target4 = jax.random.normal(k[6], shape4, dtype=jnp.float32).astype(jnp.bfloat16)
    x4 = jax.random.normal(k[7], shape4, dtype=jnp.float32).astype(jnp.bfloat16)
    loss4 = jax.block_until_ready(
        _content_mse(x4, _to_slab(target4), max_block_rows=32))
    ref_loss4 = jnp.mean(
        (x4.astype(jnp.float32) - target4.astype(jnp.float32)) ** 2)
    assert jnp.allclose(loss4, ref_loss4, rtol=1e-5, atol=1e-6), (loss4, ref_loss4)

    print("KERNEL_OK")
</pallas_src>

<mosaic_0001>
module attributes {stable_mosaic.version = 11 : i64} {
  func.func @_mse_kernel(%arg0: i32, %arg1: i32, %arg2: memref<32x128xf32, #tpu.memory_space<vmem>>, %arg3: memref<32x128xf32, #tpu.memory_space<vmem>>, %arg4: memref<8x128xf32, #tpu.memory_space<vmem>>, %arg5: memref<8x128xf32, #tpu.memory_space<vmem>>) attributes {dimension_semantics = [#tpu.dimension_semantics<parallel>, #tpu.dimension_semantics<arbitrary>], iteration_bounds = array<i64: 1, 1>, scalar_prefetch = 0 : i64, scratch_operands = 1 : i64, tpu.core_type = #tpu.core_type<tc>, window_params = [{transform_indices = @transform_0, window_bounds = array<i64: 32, 128>}, {transform_indices = @transform_1, window_bounds = array<i64: 32, 128>}, {transform_indices = @transform_2, window_bounds = array<i64: 8, 128>}]} {
    %c0_i32 = arith.constant 0 : i32
    %0 = arith.cmpi eq, %arg1, %c0_i32 : i32
    %1 = arith.extui %0 : i1 to i32
    %c0_i32_0 = arith.constant 0 : i32
    %2 = arith.cmpi ne, %1, %c0_i32_0 : i32
    scf.if %2 {
      %cst_10 = arith.constant 0.000000e+00 : f32
      %15 = vector.broadcast %cst_10 : f32 to vector<8x128xf32>
      %c0_11 = arith.constant 0 : index
      %c0_12 = arith.constant 0 : index
      %16 = vector.load %arg5[%c0_11, %c0_12] : memref<8x128xf32, #tpu.memory_space<vmem>>, vector<8x128xf32>
      tpu.vector_store %arg5[%c0_11, %c0_12], %15 {strides = array<i32>} : memref<8x128xf32, #tpu.memory_space<vmem>>, vector<8x128xf32>,
    } else {
    }
    %c0 = arith.constant 0 : index
    %c0_1 = arith.constant 0 : index
    %3 = vector.load %arg2[%c0, %c0_1] : memref<32x128xf32, #tpu.memory_space<vmem>>, vector<32x128xf32>
    %c0_2 = arith.constant 0 : index
    %c0_3 = arith.constant 0 : index
    %4 = vector.load %arg3[%c0_2, %c0_3] : memref<32x128xf32, #tpu.memory_space<vmem>>, vector<32x128xf32>
    %5 = arith.subf %3, %4 : vector<32x128xf32>
    %6 = arith.mulf %5, %5 : vector<32x128xf32>
    %c0_4 = arith.constant 0 : index
    %c0_5 = arith.constant 0 : index
    %7 = vector.load %arg5[%c0_4, %c0_5] : memref<8x128xf32, #tpu.memory_space<vmem>>, vector<8x128xf32>
    %8 = vector.shape_cast %6 : vector<32x128xf32> to vector<4x8x128xf32>
    %cst = arith.constant dense<0.000000e+00> : vector<8x128xf32>
    %9 = vector.multi_reduction <add>, %8, %cst [0] : vector<4x8x128xf32> to vector<8x128xf32>
    %10 = arith.addf %7, %9 : vector<8x128xf32>
    %c0_6 = arith.constant 0 : index
    %c0_7 = arith.constant 0 : index
    %11 = vector.load %arg5[%c0_6, %c0_7] : memref<8x128xf32, #tpu.memory_space<vmem>>, vector<8x128xf32>
    tpu.vector_store %arg5[%c0_6, %c0_7], %10 {strides = array<i32>} : memref<8x128xf32, #tpu.memory_space<vmem>>, vector<8x128xf32>,
    %c0_i32_8 = arith.constant 0 : i32
    %12 = arith.cmpi eq, %arg1, %c0_i32_8 : i32
    %13 = arith.extui %12 : i1 to i32
    %c0_i32_9 = arith.constant 0 : i32
    %14 = arith.cmpi ne, %13, %c0_i32_9 : i32
    scf.if %14 {
      %c0_10 = arith.constant 0 : index
      %c0_11 = arith.constant 0 : index
      %15 = vector.load %arg5[%c0_10, %c0_11] : memref<8x128xf32, #tpu.memory_space<vmem>>, vector<8x128xf32>
      %c0_12 = arith.constant 0 : index
      %c0_13 = arith.constant 0 : index
      %16 = vector.load %arg4[%c0_12, %c0_13] : memref<8x128xf32, #tpu.memory_space<vmem>>, vector<8x128xf32>
      tpu.vector_store %arg4[%c0_12, %c0_13], %15 {strides = array<i32>} : memref<8x128xf32, #tpu.memory_space<vmem>>, vector<8x128xf32>,
    } else {
    }
    return
  }
  func.func @transform_0(%arg0: i32, %arg1: i32) -> (i32, i32) {
    %c1_i32 = arith.constant 1 : i32
    %0 = arith.muli %arg0, %c1_i32 : i32
    %1 = arith.addi %0, %arg1 : i32
    %c0_i32 = arith.constant 0 : i32
    %2 = arith.minsi %1, %c0_i32 : i32
    %c0_i32_0 = arith.constant 0 : i32
    %c0_i32_1 = arith.constant 0 : i32
    return %2, %c0_i32_0 : i32, i32
  }
  func.func @transform_1(%arg0: i32, %arg1: i32) -> (i32, i32) {
    %c1_i32 = arith.constant 1 : i32
    %0 = arith.muli %arg0, %c1_i32 : i32
    %1 = arith.addi %0, %arg1 : i32
    %c0_i32 = arith.constant 0 : i32
    %2 = arith.minsi %1, %c0_i32 : i32
    %c0_i32_0 = arith.constant 0 : i32
    %c0_i32_1 = arith.constant 0 : i32
    return %2, %c0_i32_0 : i32, i32
  }
  func.func @transform_2(%arg0: i32, %arg1: i32) -> (i32, i32) {
    %c0_i32 = arith.constant 0 : i32
    %c0_i32_0 = arith.constant 0 : i32
    return %arg0, %c0_i32 : i32, i32
  }
}

</mosaic_0001>

<llo_original>
// kernel: _content_mse.1
$region0: #{_content_mse.1}
  #allocation0 [shape = 'u32[]', space=smem, size = 0x4, offset = 0x4, fixed_abs, tag = 'smem constant byte address 0x4 - core index']
  #allocation1 [shape = 'u32[144,128]{1,0:T(1,128)}', space=vmem, size = 0x12000, scoped, tag = 'internal scratch']
  #allocation2 [shape = 'f32[8,128]{1,0:T(8,128)}', space=vmem, size = 0x1000, scoped, tag = 'scratch operand']
  %s0 = inlined_call_operand.vmem [shape: f32[32,128], index: 0, kind: input, shape index: {}]
  %s1 = inlined_call_operand.vmem [shape: f32[32,128], index: 1, kind: input, shape index: {}]
  %s2 = inlined_call_operand.vmem [shape: f32[8,128], index: 2, kind: output, shape index: {}]
  %s3 = sld [smem:[#allocation0]]
  $region26: #{_content_mse.1} parent=0
    _
  %s5 = ssub.s32 1, %s3
  %s6 = scalar_select 0, %s5, %s3
  // Predicated region
  $region2: #{_content_mse.1} parent=0 // pred_check
    _
  $region3: #{_content_mse.1} parent=0 // pred_check_branch
    %8 = sbr.rel (0) target = $region5
  $region4: #{_content_mse.1} parent=0 // pred_region
    %s9 = sadd.s32 0, 0
    %p10 = scmp.lt.s32.totalorder %s9, 0
    %s11 = scalar_select %p10, %s9, 0
    %s12 = smul.u32 4, %s11
    %p13 = scmp.lt.s32.totalorder %s12, 3
    %s14 = scalar_select %p13, %s12, 3
    %s15 = smul.addr %s14, 8
    %s16 = scalar_lea.vmem %s0, %s15
    %s17 = sadd.s32 0, 0
    %p18 = scmp.lt.s32.totalorder %s17, 0
    %s19 = scalar_select %p18, %s17, 0
    %s20 = smul.u32 4, %s19
  $region5: #{_content_mse.1} parent=0 // pred_fallthru
    _
  // Predicated region
  $region6: #{_content_mse.1} parent=0 // pred_check
    _
  $region7: #{_content_mse.1} parent=0 // pred_check_branch
    %22 = sbr.rel (0) target = $region9
  $region8: #{_content_mse.1} parent=0 // pred_region
    %s23 = sadd.s32 0, 0
    %p24 = scmp.lt.s32.totalorder %s23, 0
    %s25 = scalar_select %p24, %s23, 0
    %s26 = smul.u32 4, %s25
    %p27 = scmp.lt.s32.totalorder %s26, 3
    %s28 = scalar_select %p27, %s26, 3
    %s29 = smul.addr %s28, 8
    %s30 = scalar_lea.vmem %s1, %s29
    %s31 = sadd.s32 0, 0
    %p32 = scmp.lt.s32.totalorder %s31, 0
    %s33 = scalar_select %p32, %s31, 0
    %s34 = smul.u32 4, %s33
  $region9: #{_content_mse.1} parent=0 // pred_fallthru
    _
  %s35 = sadd.s32 0, 0
  %p36 = scmp.lt.s32.totalorder %s35, 0
  %s37 = scalar_select %p36, %s35, 0
  %s38 = smul.u32 4, %s37
  %p39 = scmp.lt.s32.totalorder %s38, 3
  %s40 = scalar_select %p39, %s38, 3
  %s41 = smul.addr %s40, 8
  %s42 = scalar_lea.vmem %s0, %s41
  %s43 = sadd.s32 0, 0
  %p44 = scmp.lt.s32.totalorder %s43, 0
  %s45 = scalar_select %p44, %s43, 0
  %s46 = smul.u32 4, %s45
  %p47 = scmp.lt.s32.totalorder %s46, 3
  %s48 = scalar_select %p47, %s46, 3
  %s49 = smul.addr %s48, 8
  %s50 = scalar_lea.vmem %s1, %s49
  %s51 = sadd.s32 0, 0
  %p52 = scmp.lt.s32.totalorder %s51, 0
  %s53 = scalar_select %p52, %s51, 0
  %s54 = smul.u32 4, %s53
  %p55 = scmp.lt.s32.totalorder %s54, 3
  %s56 = scalar_select %p55, %s54, 3
  %s57 = smul.addr %s56, 8
  %s58 = scalar_lea.vmem %s0, %s57
  %s59 = sadd.s32 0, 0
  %p60 = scmp.lt.s32.totalorder %s59, 0
  %s61 = scalar_select %p60, %s59, 0
  %s62 = smul.u32 4, %s61
  %s63 = sadd.s32 0, 0
  %p64 = scmp.lt.s32.totalorder %s63, 0
  %s65 = scalar_select %p64, %s63, 0
  %s66 = smul.u32 4, %s65
  %p67 = scmp.lt.s32.totalorder %s66, 3
  %s68 = scalar_select %p67, %s66, 3
  %s69 = smul.addr %s68, 8
  %s70 = scalar_lea.vmem %s1, %s69
  %s71 = sadd.s32 0, 0
  %p72 = scmp.lt.s32.totalorder %s71, 0
  %s73 = scalar_select %p72, %s71, 0
  %s74 = smul.u32 4, %s73
  %p75 = scmp.eq.s32.totalorder 0, 0
  // Predicated region
  $region10: #{_content_mse.1} parent=0 // pred_check
    %p76 = pneg %p75
  $region11: #{_content_mse.1} parent=0 // pred_check_branch
    %78 = sbr.rel (%p76) target = $region13
  $region12: #{_content_mse.1} parent=0 // pred_region
    %79 = vst [vmem:[#allocation2] sm:$0xff] 0.0
  $region13: #{_content_mse.1} parent=0 // pred_fallthru
    _
  %v80 = vld [vmem:[%s58] sm:$0xff]
  %v81 = vld [vmem:[%s58 + $0x8] sm:$0xff]
  %v82 = vld [vmem:[%s58 + $0x10] sm:$0xff]
  %v83 = vld [vmem:[%s58 + $0x18] sm:$0xff]
  %v84 = vld [vmem:[%s70] sm:$0xff]
  %v85 = vld [vmem:[%s70 + $0x8] sm:$0xff]
  %v86 = vld [vmem:[%s70 + $0x10] sm:$0xff]
  %v87 = vld [vmem:[%s70 + $0x18] sm:$0xff]
  %v88 = vsub.f32 %v80, %v84
  %v89 = vsub.f32 %v81, %v85
  %v90 = vsub.f32 %v82, %v86
  %v91 = vsub.f32 %v83, %v87
  %v92 = vmul.f32 %v88, %v88
  %v93 = vmul.f32 %v89, %v89
  %v94 = vmul.f32 %v90, %v90
  %v95 = vmul.f32 %v91, %v91
  %v96 = vld [vmem:[#allocation2] sm:$0xff]
  %v97 = vadd.f32 %v92, %v93
  %v98 = vadd.f32 %v97, %v94
  %v99 = vadd.f32 %v98, %v95
  %v100 = vadd.f32 %v96, %v99
  %101 = vst [vmem:[#allocation2] sm:$0xff] %v100
  // Predicated region
  $region14: #{_content_mse.1} parent=0 // pred_check
    %p102 = pneg %p75
  $region15: #{_content_mse.1} parent=0 // pred_check_branch
    %104 = sbr.rel (%p102) target = $region17
  $region16: #{_content_mse.1} parent=0 // pred_region
    %v105 = vld [vmem:[#allocation2] sm:$0xff]
    %106 = vst [vmem:[%s2] sm:$0xff] %v105
  $region17: #{_content_mse.1} parent=0 // pred_fallthru
    _
  // Predicated region
  $region18: #{_content_mse.1} parent=0 // pred_check
    _
  $region19: #{_content_mse.1} parent=0 // pred_check_branch
    %108 = sbr.rel (0) target = $region21
  $region20: #{_content_mse.1} parent=0 // pred_region
    _
  $region21: #{_content_mse.1} parent=0 // pred_fallthru
    _
  // Predicated region
  $region22: #{_content_mse.1} parent=0 // pred_check
    _
  $region23: #{_content_mse.1} parent=0 // pred_check_branch
    %110 = sbr.rel (0) target = $region25
  $region24: #{_content_mse.1} parent=0 // pred_region
    _
  $region25: #{_content_mse.1} parent=0 // pred_fallthru
    _

</llo_original>
